<compile_context>
chip_gen: v6e
topology: v6e:2x2x1
jax: 0.10.0
libtpu: 0.0.40
codegen_flags: <defaults>
</compile_context>

<pallas_src>
import functools
import math

import jax
import jax.numpy as jnp
from jax import lax
from jax.experimental import pallas as pl
from jax.experimental.pallas import tpu as pltpu


def _round_up(a, b):
    return ((a + b - 1) // b) * b


def _bce_partial_kernel(pred_ref, label_ref, out_ref, *, block_rows, lane,
                        chunk_rows, n_chunks, full_rows, rem, mask_needed):
    """One grid step: partial BCE-with-logits sum over a (block_rows, lane) tile.

    Writes a lane/sublane-dense (1, 8, lane) partial-sum block. Elements past
    the valid `total` (partial last block rows read as garbage by Pallas, or a
    tiny wrapper pad) are zeroed via an iota mask before the reduction.
    """
    base_row = pl.program_id(0) * block_rows

    def body(c, acc):
        r0 = pl.multiple_of(c * chunk_rows, 8)
        x = pred_ref[pl.ds(r0, chunk_rows), :].astype(jnp.float32)
        y = label_ref[pl.ds(r0, chunk_rows), :].astype(jnp.float32)
        # Numerically stable per-element BCE with logits:
        #   max(x, 0) - x*y + log1p(exp(-|x|))
        loss = jnp.maximum(x, 0.0) - x * y + jnp.log1p(jnp.exp(-jnp.abs(x)))
        if mask_needed:
            row = base_row + r0 + lax.broadcasted_iota(jnp.int32, loss.shape, 0)
            if rem:
                col = lax.broadcasted_iota(jnp.int32, loss.shape, 1)
                valid = (row < full_rows) | ((row == full_rows) & (col < rem))
            else:
                valid = row < full_rows
            loss = jnp.where(valid, loss, 0.0)
        # Sublane-group reduce (VPU adds only, no cross-lane work):
        # (chunk_rows, lane) -> (8, lane).
        return acc + jnp.sum(loss.reshape(chunk_rows // 8, 8, lane), axis=0)

    acc = lax.fori_loop(0, n_chunks, body,
                        jnp.zeros((8, lane), jnp.float32), unroll=True)
    out_ref[...] = acc.reshape(1, 8, lane)


def custom_loss(pred, label_dict, *, max_block_rows=2048):
    """Pallas equivalent of CustomLoss.forward: (BCEWithLogitsLoss(pred, label), {})."""
    label = label_dict["label"]
    total = math.prod(pred.shape)
    assert math.prod(label.shape) == total

    # Widest lane count that lets us reshape the flat inputs for free (no HBM copy).
    lane = None
    for cand in (512, 256, 128):
        if total % cand == 0:
            lane = cand
            break

    pred_flat = pred.reshape(-1)
    label_flat = label.reshape(-1)   # keep native dtype; cast in-kernel

    if lane is None:
        # TODO(synk): this pad copies both inputs; only hit when total % 128 != 0.
        lane = 128
        padded_total = _round_up(total, lane)
        pad = padded_total - total
        pred_flat = jnp.pad(pred_flat, (0, pad))
        label_flat = jnp.pad(label_flat, (0, pad))
    else:
        padded_total = total

    rows = padded_total // lane
    full_rows, rem = divmod(total, lane)

    # Block sizing: aim for >= 4 grid steps (v7x megacore + pipelining) while
    # capping the per-step tile at max_block_rows (~4 MiB/input at lane=512).
    target = max(8, -(-rows // 4))
    if target <= 256:
        block_rows = _round_up(target, 8)
        chunk_rows = block_rows
    else:
        block_rows = min(_round_up(max_block_rows, 256), _round_up(target, 256))
        chunk_rows = 256
    n_chunks = block_rows // chunk_rows
    num_blocks = -(-rows // block_rows)
    mask_needed = (rem != 0) or (num_blocks * block_rows != rows)

    pred2d = pred_flat.reshape(rows, lane)
    label2d = label_flat.reshape(rows, lane)

    kernel = functools.partial(
        _bce_partial_kernel,
        block_rows=block_rows, lane=lane, chunk_rows=chunk_rows,
        n_chunks=n_chunks, full_rows=full_rows, rem=rem,
        mask_needed=mask_needed)

    out_bytes = num_blocks * 8 * lane * 4
    cost = pl.CostEstimate(
        flops=6 * total,
        transcendentals=2 * total,
        bytes_accessed=int(pred.size) * pred.dtype.itemsize
        + int(label.size) * label.dtype.itemsize + out_bytes)

    partials = pl.pallas_call(
        kernel,
        out_shape=jax.ShapeDtypeStruct((num_blocks, 8, lane), jnp.float32),
        grid=(num_blocks,),
        in_specs=[
            pl.BlockSpec((block_rows, lane), lambda i: (i, 0)),
            pl.BlockSpec((block_rows, lane), lambda i: (i, 0)),
        ],
        out_specs=pl.BlockSpec((1, 8, lane), lambda i: (i, 0, 0)),
        compiler_params=pltpu.CompilerParams(
            dimension_semantics=("parallel",),
            vmem_limit_bytes=48 * 1024 * 1024,
        ),
        cost_estimate=cost,
    )(pred2d, label2d)

    mean_loss = (jnp.sum(partials) / jnp.float32(total)).astype(jnp.float32)
    return mean_loss, {}


def _ref_bce(pred, label):
    x = pred.reshape(-1).astype(jnp.float32)
    y = label.reshape(-1).astype(jnp.float32)
    return jnp.mean(jnp.maximum(x, 0.0) - x * y + jnp.log1p(jnp.exp(-jnp.abs(x))))


if __name__ == "__main__":
    key = jax.random.PRNGKey(0)
    k1, k2 = jax.random.split(key)

    # pred shape (B, C, N, X, Y) — small synthetic sizes consistent with the module.
    B, C, N, X, Y = 2, 4, 8, 16, 16
    pred = jax.random.normal(k1, (B, C, N, X, Y), dtype=jnp.float32)
    label = (jax.random.uniform(k2, (B, C, N, X, Y)) > 0.5).astype(jnp.float32)

    loss, extras = custom_loss(pred, {"label": label})
    loss = jax.block_until_ready(loss)
    ref = _ref_bce(pred, label)
    assert jnp.allclose(loss, ref, rtol=1e-5, atol=1e-6), (loss, ref)
    assert extras == {}

    # Awkward (non-divisible) shape exercises the fallback pad + in-kernel mask path.
    k3, k4 = jax.random.split(k1)
    pred2 = jax.random.normal(k3, (2, 3, 5, 7, 11), dtype=jnp.float32)
    label2 = (jax.random.uniform(k4, (2, 3, 5, 7, 11)) > 0.5).astype(jnp.float32)
    loss2, _ = custom_loss(pred2, {"label": label2})
    loss2 = jax.block_until_ready(loss2)
    ref2 = _ref_bce(pred2, label2)
    assert jnp.allclose(loss2, ref2, rtol=1e-5, atol=1e-6), (loss2, ref2)

    # Shape divisible by 128 but not 512/256 and not a multiple of the block:
    # exercises the zero-copy lane fallback + partial-last-block mask path.
    k5, k6 = jax.random.split(k3)
    pred3 = jax.random.normal(k5, (2, 3, 3, 8, 16), dtype=jnp.float32)
    label3 = (jax.random.uniform(k6, (2, 3, 3, 8, 16)) > 0.5).astype(jnp.float32)
    loss3, _ = custom_loss(pred3, {"label": label3})
    loss3 = jax.block_until_ready(loss3)
    ref3 = _ref_bce(pred3, label3)
    assert jnp.allclose(loss3, ref3, rtol=1e-5, atol=1e-6), (loss3, ref3)

    print("KERNEL_OK")
</pallas_src>

<mosaic_0001>
module attributes {stable_mosaic.version = 11 : i64} {
  func.func @_bce_partial_kernel(%arg0: i32, %arg1: memref<8x512xf32, #tpu.memory_space<vmem>>, %arg2: memref<8x512xf32, #tpu.memory_space<vmem>>, %arg3: memref<1x8x512xf32, #tpu.memory_space<vmem>>) attributes {dimension_semantics = [#tpu.dimension_semantics<parallel>], iteration_bounds = array<i64: 4>, scalar_prefetch = 0 : i64, scratch_operands = 0 : i64, tpu.core_type = #tpu.core_type<tc>, window_params = [{transform_indices = @transform_0, window_bounds = array<i64: 8, 512>}, {transform_indices = @transform_1, window_bounds = array<i64: 8, 512>}, {transform_indices = @transform_2, window_bounds = array<i64: 1, 8, 512>}]} {
    %cst = arith.constant 0.000000e+00 : f32
    %0 = vector.broadcast %cst : f32 to vector<8x512xf32>
    %c0_i32 = arith.constant 0 : i32
    %c8_i32 = arith.constant 8 : i32
    %1 = arith.muli %c0_i32, %c8_i32 : i32
    %2 = tpu.assume_multiple %1, 8 : i32
    %3 = arith.index_cast %2 : i32 to index
    %c0 = arith.constant 0 : index
    %4 = vector.load %arg1[%3, %c0] : memref<8x512xf32, #tpu.memory_space<vmem>>, vector<8x512xf32>
    %5 = arith.index_cast %2 : i32 to index
    %c0_0 = arith.constant 0 : index
    %6 = vector.load %arg2[%5, %c0_0] : memref<8x512xf32, #tpu.memory_space<vmem>>, vector<8x512xf32>
    %cst_1 = arith.constant 0.000000e+00 : f32
    %7 = vector.broadcast %cst_1 : f32 to vector<8x512xf32>
    %8 = arith.maximumf %4, %7 : vector<8x512xf32>
    %9 = arith.mulf %4, %6 : vector<8x512xf32>
    %10 = arith.subf %8, %9 : vector<8x512xf32>
    %11 = math.absf %4 : vector<8x512xf32>
    %cst_2 = arith.constant 0.000000e+00 : f32
    %12 = vector.broadcast %cst_2 : f32 to vector<8x512xf32>
    %13 = arith.subf %12, %11 : vector<8x512xf32>
    %14 = math.exp %13 : vector<8x512xf32>
    %15 = math.log1p %14 : vector<8x512xf32>
    %16 = arith.addf %10, %15 : vector<8x512xf32>
    %17 = vector.shape_cast %16 : vector<8x512xf32> to vector<1x8x512xf32>
    %cst_3 = arith.constant dense<0.000000e+00> : vector<8x512xf32>
    %18 = vector.multi_reduction <add>, %17, %cst_3 [0] : vector<1x8x512xf32> to vector<8x512xf32>
    %19 = arith.addf %0, %18 : vector<8x512xf32>
    %c1_i32 = arith.constant 1 : i32
    %20 = vector.shape_cast %19 : vector<8x512xf32> to vector<1x8x512xf32>
    %c0_4 = arith.constant 0 : index
    %c0_5 = arith.constant 0 : index
    %c0_6 = arith.constant 0 : index
    %21 = vector.load %arg3[%c0_4, %c0_5, %c0_6] : memref<1x8x512xf32, #tpu.memory_space<vmem>>, vector<1x8x512xf32>
    tpu.vector_store %arg3[%c0_4, %c0_5, %c0_6], %20 {strides = array<i32>} : memref<1x8x512xf32, #tpu.memory_space<vmem>>, vector<1x8x512xf32>,
    return
  }
  func.func @transform_0(%arg0: i32) -> (i32, i32) {
    %c0_i32 = arith.constant 0 : i32
    %c0_i32_0 = arith.constant 0 : i32
    return %arg0, %c0_i32 : i32, i32
  }
  func.func @transform_1(%arg0: i32) -> (i32, i32) {
    %c0_i32 = arith.constant 0 : i32
    %c0_i32_0 = arith.constant 0 : i32
    return %arg0, %c0_i32 : i32, i32
  }
  func.func @transform_2(%arg0: i32) -> (i32, i32, i32) {
    %c0_i32 = arith.constant 0 : i32
    %c0_i32_0 = arith.constant 0 : i32
    %c0_i32_1 = arith.constant 0 : i32
    return %arg0, %c0_i32, %c0_i32_0 : i32, i32, i32
  }
}

</mosaic_0001>

<llo_original>
// kernel: tpu_custom_call.1
$region0: #{tpu_custom_call.1}
  #allocation0 [shape = 'u32[]', space=smem, size = 0x4, offset = 0x4, fixed_abs, tag = 'smem constant byte address 0x4 - core index']
  #allocation1 [shape = 'u32[144,128]{1,0:T(1,128)}', space=vmem, size = 0x12000, scoped, tag = 'internal scratch']
  %s0 = inlined_call_operand.hbm [shape: f32[32,512], index: 0, kind: input, shape index: {}]
  %s1 = inlined_call_operand.hbm [shape: f32[32,512], index: 1, kind: input, shape index: {}]
  %s2 = inlined_call_operand.hbm [shape: f32[4,8,512], index: 2, kind: output, shape index: {}]
  %s3 = sld [smem:[#allocation0]]
  $region49: #{tpu_custom_call.1} parent=0
    _
  %s5 = ssub.s32 1, %s3
  %s6 = scalar_select 0, %s5, %s3
  $region1: #{tpu_custom_call.1} parent=0
    #allocation2 [shape = 'u8[32768]{0}', space=vmem, size = 0x8000, scoped, tag = 'input window, operand 0']
    #allocation3 [shape = 's32[2]{0}', space=sflag, size = 0x8, scoped, tag = 'scoped memory for tpu_custom_call.1']
    #allocation4 [shape = 's32[2]{0}', space=sflag, size = 0x8, scoped, tag = 'scoped memory for tpu_custom_call.1']
    #allocation5 [shape = 'u8[32768]{0}', space=vmem, size = 0x8000, scoped, tag = 'input window, operand 1']
    #allocation6 [shape = 's32[2]{0}', space=sflag, size = 0x8, scoped, tag = 'scoped memory for tpu_custom_call.1']
    #allocation7 [shape = 'u8[32768]{0}', space=vmem, size = 0x8000, scoped, tag = 'output window, operand 0']
    %7 = vsyncpa [#allocation3], 0
    %s8 = scalar_lea.sflag [#allocation3], 1
    %9 = vsyncpa %s8, 0
    %10 = vsyncpa [#allocation6], 0
    %s11 = scalar_lea.sflag [#allocation6], 1
    %12 = vsyncpa %s11, 0
    %13 = vsyncpa [#allocation4], 0
    %s14 = scalar_lea.sflag [#allocation4], 1
    %15 = vsyncpa %s14, 0
    loop: start=0, step=1, limit=6
    $region2: #{tpu_custom_call.1} parent=1 // loop_pre_header
      _
    $region3: #{tpu_custom_call.1} parent=1 // loop_header
      %s17 = sphi 0, %s21
      %p18 = scmp.ge.s32.totalorder %s17, 6
      %s27 = sphi 0, %s29
      %s30 = sphi 0, %s27
      %s31 = sphi 0, %s30
      %s47 = sphi 0, %s31
      %s53 = sphi 0, %s55
      %s56 = sphi 0, %s53
      %s57 = sphi 0, %s56
      %s73 = sphi 0, %s57
      %s79 = sphi 0, %s81
      %s82 = sphi 0, %s79
      %s83 = sphi 0, %s82
      %s99 = sphi 0, %s83
    $region4: #{tpu_custom_call.1} parent=1 // loop_header_branch
      %20 = sbr.rel (%p18) target = $region8
    $region5: #{tpu_custom_call.1} parent=1 // loop_body
      %s22 = ssub.s32 %s17, 1
      %s23 = ssub.s32 %s17, 2
      %s24 = sadd.s32 %s17, 1
      %s25 = ssub.s32 %s17, %s24
      %p26 = scmp.eq.s32.totalorder %s25, 0
      %s28 = sadd.s32 %s27, 1
      %s29 = scalar_select %p26, %s27, %s28
      %p32 = pneg %p26
      %p33 = scmp.eq.s32.totalorder %s17, 3
      %p34 = por %p32, %p33
      %p35 = scmp.ne.s32.totalorder %s27, %s30
      %p36 = scmp.eq.s32.totalorder %s17, 0
      %p37 = por %p35, %p36
      %p38 = scmp.ne.s32.totalorder %s27, %s30
      %p39 = scmp.eq.s32.totalorder %s22, 3
      %p40 = por %p38, %p39
      %p41 = scmp.ne.s32.totalorder %s30, %s31
      %p42 = scmp.eq.s32.totalorder %s22, 0
      %p43 = por %p41, %p42
      %p44 = scmp.ne.s32.totalorder %s30, %s31
      %p45 = scmp.eq.s32.totalorder %s23, 3
      %p46 = por %p44, %p45
      %p48 = scmp.ne.s32.totalorder %s31, %s47
      %p49 = scmp.eq.s32.totalorder %s23, 0
      %p50 = por %p48, %p49
      %s51 = ssub.s32 %s17, %s24
      %p52 = scmp.eq.s32.totalorder %s51, 0
      %s54 = sadd.s32 %s53, 1
      %s55 = scalar_select %p52, %s53, %s54
      %p58 = pneg %p52
      %p59 = scmp.eq.s32.totalorder %s17, 3
      %p60 = por %p58, %p59
      %p61 = scmp.ne.s32.totalorder %s53, %s56
      %p62 = scmp.eq.s32.totalorder %s17, 0
      %p63 = por %p61, %p62
      %p64 = scmp.ne.s32.totalorder %s53, %s56
      %p65 = scmp.eq.s32.totalorder %s22, 3
      %p66 = por %p64, %p65
      %p67 = scmp.ne.s32.totalorder %s56, %s57
      %p68 = scmp.eq.s32.totalorder %s22, 0
      %p69 = por %p67, %p68
      %p70 = scmp.ne.s32.totalorder %s56, %s57
      %p71 = scmp.eq.s32.totalorder %s23, 3
      %p72 = por %p70, %p71
      %p74 = scmp.ne.s32.totalorder %s57, %s73
      %p75 = scmp.eq.s32.totalorder %s23, 0
      %p76 = por %p74, %p75
      %s77 = ssub.s32 %s17, %s24
      %p78 = scmp.eq.s32.totalorder %s77, 0
      %s80 = sadd.s32 %s79, 1
      %s81 = scalar_select %p78, %s79, %s80
      %p84 = pneg %p78
      %p85 = scmp.eq.s32.totalorder %s17, 3
      %p86 = por %p84, %p85
      %p87 = scmp.ne.s32.totalorder %s79, %s82
      %p88 = scmp.eq.s32.totalorder %s17, 0
      %p89 = por %p87, %p88
      %p90 = scmp.ne.s32.totalorder %s79, %s82
      %p91 = scmp.eq.s32.totalorder %s22, 3
      %p92 = por %p90, %p91
      %p93 = scmp.ne.s32.totalorder %s82, %s83
      %p94 = scmp.eq.s32.totalorder %s22, 0
      %p95 = por %p93, %p94
      %p96 = scmp.ne.s32.totalorder %s82, %s83
      %p97 = scmp.eq.s32.totalorder %s23, 3
      %p98 = por %p96, %p97
      %p100 = scmp.ne.s32.totalorder %s83, %s99
      %p101 = scmp.eq.s32.totalorder %s23, 0
      %p102 = por %p100, %p101
      %p103 = scmp.le.s32.totalorder 1, %s17
      %p104 = scmp.lt.s32.totalorder %s17, 5
      %p105 = pnand %p103, %p104
      %p106 = pneg %p105
      // Predicated region
      $region9: #{tpu_custom_call.1} parent=5 // pred_check
        _
      $region10: #{tpu_custom_call.1} parent=5 // pred_check_branch
        %108 = sbr.rel (%p105) target = $region12
      $region11: #{tpu_custom_call.1} parent=5 // pred_region
        %s109 = ssub.s32 %s17, 1
      $region12: #{tpu_custom_call.1} parent=5 // pred_fallthru
        _
      %p110 = scmp.lt.s32.totalorder %s17, 4
      // Predicated region
      $region13: #{tpu_custom_call.1} parent=5 // pred_check
        %p111 = pneg %p110
      $region14: #{tpu_custom_call.1} parent=5 // pred_check_branch
        %113 = sbr.rel (%p111) target = $region16
      $region15: #{tpu_custom_call.1} parent=5 // pred_region
        // Predicated region
        $region17: #{tpu_custom_call.1} parent=15 // pred_check
          %p114 = pneg %p37
        $region18: #{tpu_custom_call.1} parent=15 // pred_check_branch
          %116 = sbr.rel (%p114) target = $region20
        $region19: #{tpu_custom_call.1} parent=15 // pred_region
          %s117 = sand.u32 %s27, 1
          %s118 = scalar_lea.sflag [#allocation3], %s117
          %s119 = sand.u32 %s27, 1
          %s120 = smul.addr %s119, 32
          %s121 = scalar_lea.vmem [#allocation2], %s120
          %s123 = ssub.s32 512, 512
          %124 = vsyncadd %s118, %s123
          %s125 = smul.addr %s17, 4
          %s126 = smul.addr %s125, 128
          %s127 = scalar_lea.hbm %s0, %s126
          %s129 = sshll.u32 %s121, 4
          %s130 = int_to_ptr.vmem [resolvable:$true] %s129
          %132 = dma.hbm_to_vmem [thread:$0]  %s127, 512, %s130, %s118
        $region20: #{tpu_custom_call.1} parent=15 // pred_fallthru
          _
        // Predicated region
        $region21: #{tpu_custom_call.1} parent=15 // pred_check
          %p133 = pneg %p63
        $region22: #{tpu_custom_call.1} parent=15 // pred_check_branch
          %135 = sbr.rel (%p133) target = $region24
        $region23: #{tpu_custom_call.1} parent=15 // pred_region
          %s136 = sand.u32 %s53, 1
          %s137 = scalar_lea.sflag [#allocation6], %s136
          %s138 = sand.u32 %s53, 1
          %s139 = smul.addr %s138, 32
          %s140 = scalar_lea.vmem [#allocation5], %s139
          %s142 = ssub.s32 512, 512
          %143 = vsyncadd %s137, %s142
          %s144 = smul.addr %s17, 4
          %s145 = smul.addr %s144, 128
          %s146 = scalar_lea.hbm %s1, %s145
          %s148 = sshll.u32 %s140, 4
          %s149 = int_to_ptr.vmem [resolvable:$true] %s148
          %151 = dma.hbm_to_vmem [thread:$0]  %s146, 512, %s149, %s137
        $region24: #{tpu_custom_call.1} parent=15 // pred_fallthru
          _
      $region16: #{tpu_custom_call.1} parent=5 // pred_fallthru
        _
      %p152 = scmp.le.s32.totalorder 1, %s17
      %p153 = scmp.lt.s32.totalorder %s17, 5
      %p154 = pnand %p152, %p153
      %p155 = pneg %p154
      // Predicated region
      $region25: #{tpu_custom_call.1} parent=5 // pred_check
        _
      $region26: #{tpu_custom_call.1} parent=5 // pred_check_branch
        %157 = sbr.rel (%p154) target = $region28
      $region27: #{tpu_custom_call.1} parent=5 // pred_region
        %s158 = ssub.s32 %s17, 1
        %s159 = sand.u32 %s30, 1
        %s160 = scalar_lea.sflag [#allocation3], %s159
        %s161 = sand.u32 %s30, 1
        %s162 = smul.addr %s161, 32
        %s163 = scalar_lea.vmem [#allocation2], %s162
        // Predicated region
        $region29: #{tpu_custom_call.1} parent=27 // pred_check
          %p164 = pneg %p43
        $region30: #{tpu_custom_call.1} parent=27 // pred_check_branch
          %166 = sbr.rel (%p164) target = $region32
        $region31: #{tpu_custom_call.1} parent=27 // pred_region
          %167 = dma.done %s160, 512
        $region32: #{tpu_custom_call.1} parent=27 // pred_fallthru
          _
        %s168 = sand.u32 %s56, 1
        %s169 = scalar_lea.sflag [#allocation6], %s168
        %s170 = sand.u32 %s56, 1
        %s171 = smul.addr %s170, 32
        %s172 = scalar_lea.vmem [#allocation5], %s171
        // Predicated region
        $region33: #{tpu_custom_call.1} parent=27 // pred_check
          %p173 = pneg %p69
        $region34: #{tpu_custom_call.1} parent=27 // pred_check_branch
          %175 = sbr.rel (%p173) target = $region36
        $region35: #{tpu_custom_call.1} parent=27 // pred_region
          %176 = dma.done %s169, 512
        $region36: #{tpu_custom_call.1} parent=27 // pred_fallthru
          _
        %s177 = sand.u32 %s30, 1
        %s178 = scalar_lea.sflag [#allocation3], %s177
        %s179 = sand.u32 %s30, 1
        %s180 = smul.addr %s179, 32
        %s181 = scalar_lea.vmem [#allocation2], %s180
        %p182 = pneg %p43
        %p183 = pneg %p40
        %s184 = sand.u32 %s56, 1
        %s185 = scalar_lea.sflag [#allocation6], %s184
        %s186 = sand.u32 %s56, 1
        %s187 = smul.addr %s186, 32
        %s188 = scalar_lea.vmem [#allocation5], %s187
        %p189 = pneg %p69
        %p190 = pneg %p66
        %p191 = pneg %p95
        %p192 = pneg %p92
        %s193 = sand.u32 %s82, 1
        %s194 = scalar_lea.sflag [#allocation4], %s193
        %s195 = sand.u32 %s82, 1
        %s196 = smul.addr %s195, 32
        %s197 = scalar_lea.vmem [#allocation7], %s196
        %s198 = smul.u32 0, 4
        %s199 = smul.addr %s198, 8
        %s200 = scalar_lea.vmem %s163, %s199 [#allocation2]
        %v201 = vld [vmem:[%s200] sm:$0xff]
        %v202 = vld [vmem:[%s200 + $0x8] sm:$0xff]
        %v203 = vld [vmem:[%s200 + $0x10] sm:$0xff]
        %v204 = vld [vmem:[%s200 + $0x18] sm:$0xff]
        %s205 = smul.addr %s198, 8
        %s206 = scalar_lea.vmem %s172, %s205 [#allocation5]
        %v207 = vld [vmem:[%s206] sm:$0xff]
        %v208 = vld [vmem:[%s206 + $0x8] sm:$0xff]
        %v209 = vld [vmem:[%s206 + $0x10] sm:$0xff]
        %v210 = vld [vmem:[%s206 + $0x18] sm:$0xff]
        %v211 = vmax.f32 %v201, 0.0
        %v212 = vmax.f32 %v202, 0.0
        %v213 = vmax.f32 %v203, 0.0
        %v214 = vmax.f32 %v204, 0.0
        %v215 = vmul.f32 %v201, %v207
        %v216 = vmul.f32 %v202, %v208
        %v217 = vmul.f32 %v203, %v209
        %v218 = vmul.f32 %v204, %v210
        %v219 = vsub.f32 %v211, %v215
        %v220 = vsub.f32 %v212, %v216
        %v221 = vsub.f32 %v213, %v217
        %v222 = vsub.f32 %v214, %v218
        %v223 = vand.u32 2147483647, %v201
        %v224 = vand.u32 2147483647, %v202
        %v225 = vand.u32 2147483647, %v203
        %v226 = vand.u32 2147483647, %v204
        %v227 = vsub.f32 0.0, %v223
        %v228 = vsub.f32 0.0, %v224
        %v229 = vsub.f32 0.0, %v225
        %v230 = vsub.f32 0.0, %v226
        %v231 = vmul.f32 %v227, 1.442695
        %v232 = vpow.pop %v231
        %v233 = vmul.f32 %v228, 1.442695
        %v234 = vpow.pop %v233
        %v235 = vmul.f32 %v229, 1.442695
        %v236 = vpow.pop %v235
        %v237 = vmul.f32 %v230, 1.442695
        %v238 = vpow.pop %v237
        %v239 = vadd.f32 %v232, 1.0
        %v240 = vlog2.pop %v239
        %v241 = vmul.f32 %v240, 0.6931472
        %v242 = vmul.f32 -0.5, %v232
        %v243 = vadd.f32 %v242, 1.0
        %v244 = vmul.f32 %v243, %v232
        %v245 = vand.u32 2147483647, %v232
        %vm246 = vcmp.lt.f32.partialorder %v245, 0.0004427343
        %v247 = vsel %vm246, %v244, %v241
        %v248 = vadd.f32 %v234, 1.0
        %v249 = vlog2.pop %v248
        %v250 = vmul.f32 %v249, 0.6931472
        %v251 = vmul.f32 -0.5, %v234
        %v252 = vadd.f32 %v251, 1.0
        %v253 = vmul.f32 %v252, %v234
        %v254 = vand.u32 2147483647, %v234
        %vm255 = vcmp.lt.f32.partialorder %v254, 0.0004427343
        %v256 = vsel %vm255, %v253, %v250
        %v257 = vadd.f32 %v236, 1.0
        %v258 = vlog2.pop %v257
        %v259 = vmul.f32 %v258, 0.6931472
        %v260 = vmul.f32 -0.5, %v236
        %v261 = vadd.f32 %v260, 1.0
        %v262 = vmul.f32 %v261, %v236
        %v263 = vand.u32 2147483647, %v236
        %vm264 = vcmp.lt.f32.partialorder %v263, 0.0004427343
        %v265 = vsel %vm264, %v262, %v259
        %v266 = vadd.f32 %v238, 1.0
        %v267 = vlog2.pop %v266
        %v268 = vmul.f32 %v267, 0.6931472
        %v269 = vmul.f32 -0.5, %v238
        %v270 = vadd.f32 %v269, 1.0
        %v271 = vmul.f32 %v270, %v238
        %v272 = vand.u32 2147483647, %v238
        %vm273 = vcmp.lt.f32.partialorder %v272, 0.0004427343
        %v274 = vsel %vm273, %v271, %v268
        %v275 = vadd.f32 %v219, %v247
        %v276 = vadd.f32 %v220, %v256
        %v277 = vadd.f32 %v221, %v265
        %v278 = vadd.f32 %v222, %v274
        %v279 = vadd.f32 %v275, 0.0
        %v280 = vadd.f32 %v276, 0.0
        %v281 = vadd.f32 %v277, 0.0
        %v282 = vadd.f32 %v278, 0.0
        %v283 = vadd.f32 %v279, 0.0
        %v284 = vadd.f32 %v280, 0.0
        %v285 = vadd.f32 %v281, 0.0
        %v286 = vadd.f32 %v282, 0.0
        %287 = vst [vmem:[%s197] sm:$0xff] %v283
        %288 = vst [vmem:[%s197 + $0x8] sm:$0xff] %v284
        %289 = vst [vmem:[%s197 + $0x10] sm:$0xff] %v285
        %290 = vst [vmem:[%s197 + $0x18] sm:$0xff] %v286
        %s291 = sand.u32 %s82, 1
        %s292 = scalar_lea.sflag [#allocation4], %s291
        %s293 = sand.u32 %s82, 1
        %s294 = smul.addr %s293, 32
        %s295 = scalar_lea.vmem [#allocation7], %s294
        // Predicated region
        $region37: #{tpu_custom_call.1} parent=27 // pred_check
          %p296 = pneg %p92
        $region38: #{tpu_custom_call.1} parent=27 // pred_check_branch
          %298 = sbr.rel (%p296) target = $region40
        $region39: #{tpu_custom_call.1} parent=27 // pred_region
          %s300 = ssub.s32 512, 512
          %301 = vsyncadd %s292, %s300
          %s302 = smul.addr %s22, 4
          %s303 = smul.addr %s302, 128
          %s304 = scalar_lea.hbm %s2, %s303
          %s306 = sshll.u32 %s295, 4
          %s307 = int_to_ptr.vmem [resolvable:$true] %s306
          %309 = dma.vmem_to_hbm [thread:$0]  %s307, 512, %s304, %s292
        $region40: #{tpu_custom_call.1} parent=27 // pred_fallthru
          _
      $region28: #{tpu_custom_call.1} parent=5 // pred_fallthru
        _
      %p310 = scmp.le.s32.totalorder 2, %s17
      // Predicated region
      $region41: #{tpu_custom_call.1} parent=5 // pred_check
        %p311 = pneg %p310
      $region42: #{tpu_custom_call.1} parent=5 // pred_check_branch
        %313 = sbr.rel (%p311) target = $region44
      $region43: #{tpu_custom_call.1} parent=5 // pred_region
        %s314 = ssub.s32 %s17, 2
        // Predicated region
        $region45: #{tpu_custom_call.1} parent=43 // pred_check
          %p315 = pneg %p98
        $region46: #{tpu_custom_call.1} parent=43 // pred_check_branch
          %317 = sbr.rel (%p315) target = $region48
        $region47: #{tpu_custom_call.1} parent=43 // pred_region
          %s318 = sand.u32 %s83, 1
          %s319 = scalar_lea.sflag [#allocation4], %s318
          %s320 = sand.u32 %s83, 1
          %s321 = smul.addr %s320, 32
          %s322 = scalar_lea.vmem [#allocation7], %s321
          %323 = dma.done %s319, 512
        $region48: #{tpu_custom_call.1} parent=43 // pred_fallthru
          _
      $region44: #{tpu_custom_call.1} parent=5 // pred_fallthru
        _
    $region6: #{tpu_custom_call.1} parent=1 // loop_footer
      %s21 = sadd.s32 1, %s17
    $region7: #{tpu_custom_call.1} parent=1 // loop_footer_branch
      %16 = sbr.rel target = $region3
    $region8: #{tpu_custom_call.1} parent=1 // loop_exit
      _
    %324 = vsyncpa [#allocation3], 1
    %s325 = scalar_lea.sflag [#allocation3], 1
    %326 = vsyncpa %s325, 1
    %327 = vsyncpa [#allocation6], 1
    %s328 = scalar_lea.sflag [#allocation6], 1
    %329 = vsyncpa %s328, 1
    %330 = vsyncpa [#allocation4], 1
    %s331 = scalar_lea.sflag [#allocation4], 1
    %332 = vsyncpa %s331, 1

</llo_original>
